<compile_context>
chip_gen: v7x
topology: tpu7x:2x2x1
jax: 0.10.0
libtpu: 0.0.40
codegen_flags: <defaults>
</compile_context>

<pallas_src>
import functools

import jax
import jax.numpy as jnp
from jax.experimental import pallas as pl
from jax.experimental.pallas import tpu as pltpu

LN_EPS = 1e-5  # PyTorch nn.LayerNorm default eps


def _vmem_capacity_bytes():
    """Per-generation VMEM capacity; conservative fallback (v7x per-TC)."""
    try:
        info = pltpu.get_tpu_info()
        cap = getattr(info, "vmem_capacity_bytes", None)
        if cap:
            return int(cap)
    except Exception:
        pass
    return 64 << 20


def _addnorm_kernel_packed(x_ref, y_ref, gamma_ref, beta_ref, seg_ref, o_ref,
                           *, eps, h):
    """x/y/o: (rb, W) with G = W // h logical rows packed per 128-lane slab."""
    x = x_ref[...].astype(jnp.float32)
    y = y_ref[...].astype(jnp.float32)
    # TODO(synk): training-mode dropout would need pltpu.prng_seed/prng_random_bits
    # and 1/(1-p) scaling; eval-mode nn.Dropout is the identity implemented here.
    s = y + x                                            # dropout(Y) + X
    seg = seg_ref[...]                                   # (W, W) block-diag ones
    inv_h = jnp.float32(1.0 / h)
    # Segmented per-logical-row sum + broadcast-back in one MXU op (MXU is idle
    # in this kernel, so this is effectively free and avoids lane relayouts).
    mean = jnp.dot(s, seg, preferred_element_type=jnp.float32,
                   precision=jax.lax.Precision.HIGHEST) * inv_h
    c = s - mean
    var = jnp.dot(c * c, seg, preferred_element_type=jnp.float32,
                  precision=jax.lax.Precision.HIGHEST) * inv_h   # biased var
    inv = jax.lax.rsqrt(var + eps)                       # EUP rsqrt, no VPU divide
    z = c * inv * gamma_ref[...] + beta_ref[...]
    o_ref[...] = z.astype(o_ref.dtype)


def _addnorm_kernel_simple(x_ref, y_ref, gamma_ref, beta_ref, o_ref, *, eps):
    """Fallback when H cannot be lane-packed (H >= 128 or 128 % H != 0)."""
    x = x_ref[...].astype(jnp.float32)
    y = y_ref[...].astype(jnp.float32)
    s = y + x
    mean = jnp.mean(s, axis=-1, keepdims=True)
    c = s - mean
    var = jnp.mean(c * c, axis=-1, keepdims=True)
    inv = jax.lax.rsqrt(var + eps)
    z = c * inv * gamma_ref[...] + beta_ref[...]
    o_ref[...] = z.astype(o_ref.dtype)


def _pick_row_block(packed_rows, width, in_dtype, out_dtype):
    """VMEM-budget-aware row tile: multiple of 8, many tiles for v7x TC sharding."""
    in_b = jnp.dtype(in_dtype).itemsize
    out_b = jnp.dtype(out_dtype).itemsize
    # 2 inputs + 1 output, each double-buffered, per packed row.
    per_row = width * (2 * in_b + out_b) * 2
    budget = _vmem_capacity_bytes() // 4      # headroom under the scoped VMEM limit
    cap = max(8, budget // max(per_row, 1))
    target = int(min(1024, cap))
    target = max(8, (target // 8) * 8)
    if packed_rows <= target:
        return packed_rows                    # small problem: single resident tile
    return target


def add_norm(x, y, gamma, beta, *, eps=LN_EPS):
    """LayerNorm(dropout(Y) + X) over the last axis; dropout is identity (eval)."""
    assert x.shape == y.shape
    orig_shape = x.shape
    h = orig_shape[-1]
    rows = x.size // h

    # Lane-dense packing: G logical rows share one 128-lane slab.
    if h < 128 and 128 % h == 0 and rows % (128 // h) == 0:
        g = 128 // h
    else:
        g = 1
    w = g * h
    packed_rows = rows // g

    x2 = x.reshape(packed_rows, w)
    y2 = y.reshape(packed_rows, w)
    g2 = jnp.tile(gamma.reshape(1, h), (1, g))
    b2 = jnp.tile(beta.reshape(1, h), (1, g))

    row_block = _pick_row_block(packed_rows, w, x.dtype, x.dtype)
    grid = (pl.cdiv(packed_rows, row_block),)

    compiler_params = pltpu.CompilerParams(
        dimension_semantics=("parallel",),    # shards row tiles across TCs on v7x
        vmem_limit_bytes=int(min(_vmem_capacity_bytes() // 2, 64 << 20)),
    )

    row_spec = pl.BlockSpec((row_block, w), lambda i: (i, 0))
    const_spec = pl.BlockSpec((1, w), lambda i: (0, 0))     # resident across steps

    if g > 1:
        lane = jnp.arange(w, dtype=jnp.int32)
        seg = (lane[:, None] // h == lane[None, :] // h).astype(jnp.float32)
        kernel = functools.partial(_addnorm_kernel_packed, eps=eps, h=h)
        in_specs = [row_spec, row_spec, const_spec, const_spec,
                    pl.BlockSpec((w, w), lambda i: (0, 0))]
        args = (x2, y2, g2, b2, seg)
    else:
        kernel = functools.partial(_addnorm_kernel_simple, eps=eps)
        in_specs = [row_spec, row_spec, const_spec, const_spec]
        args = (x2, y2, g2, b2)

    out = pl.pallas_call(
        kernel,
        out_shape=jax.ShapeDtypeStruct((packed_rows, w), x.dtype),
        grid=grid,
        in_specs=in_specs,
        out_specs=row_spec,
        compiler_params=compiler_params,
    )(*args)
    return out.reshape(orig_shape)


def _add_norm_ref(x, y, gamma, beta, eps=LN_EPS):
    s = (y + x).astype(jnp.float32)
    mean = jnp.mean(s, axis=-1, keepdims=True)
    var = jnp.mean((s - mean) ** 2, axis=-1, keepdims=True)
    return (s - mean) / jnp.sqrt(var + eps) * gamma + beta


if __name__ == "__main__":
    B, T, H = 2, 8, 32
    key = jax.random.PRNGKey(0)
    kx, ky = jax.random.split(key)
    x = jax.random.normal(kx, (B, T, H), jnp.float32)
    y = jax.random.normal(ky, (B, T, H), jnp.float32)
    # Freshly-initialized nn.LayerNorm(H): weight = 1, bias = 0.
    gamma = jnp.ones((H,), jnp.float32)
    beta = jnp.zeros((H,), jnp.float32)

    out = jax.block_until_ready(add_norm(x, y, gamma, beta))
    ref = _add_norm_ref(x, y, gamma, beta)

    assert out.shape == (B, T, H)
    assert jnp.allclose(out, ref, atol=1e-5, rtol=1e-5), float(
        jnp.max(jnp.abs(out - ref)))
    print("KERNEL_OK")
</pallas_src>

<mosaic_0001>
module attributes {stable_mosaic.version = 11 : i64} {
  func.func @_addnorm_kernel_packed(%arg0: i32, %arg1: memref<4x128xf32, #tpu.memory_space<vmem>>, %arg2: memref<4x128xf32, #tpu.memory_space<vmem>>, %arg3: memref<1x128xf32, #tpu.memory_space<vmem>>, %arg4: memref<1x128xf32, #tpu.memory_space<vmem>>, %arg5: memref<128x128xf32, #tpu.memory_space<vmem>>, %arg6: memref<4x128xf32, #tpu.memory_space<vmem>>) attributes {dimension_semantics = [#tpu.dimension_semantics<parallel>], iteration_bounds = array<i64: 1>, scalar_prefetch = 0 : i64, scratch_operands = 0 : i64, tpu.core_type = #tpu.core_type<tc>, window_params = [{transform_indices = @transform_0, window_bounds = array<i64: 4, 128>}, {transform_indices = @transform_1, window_bounds = array<i64: 4, 128>}, {pipeline_mode = #tpu.pipeline_mode<synchronous>, transform_indices = @transform_2, window_bounds = array<i64: 1, 128>}, {pipeline_mode = #tpu.pipeline_mode<synchronous>, transform_indices = @transform_3, window_bounds = array<i64: 1, 128>}, {pipeline_mode = #tpu.pipeline_mode<synchronous>, transform_indices = @transform_4, window_bounds = array<i64: 128, 128>}, {transform_indices = @transform_5, window_bounds = array<i64: 4, 128>}]} {
    %c0 = arith.constant 0 : index
    %c0_0 = arith.constant 0 : index
    %0 = vector.load %arg1[%c0, %c0_0] : memref<4x128xf32, #tpu.memory_space<vmem>>, vector<4x128xf32>
    %c0_1 = arith.constant 0 : index
    %c0_2 = arith.constant 0 : index
    %1 = vector.load %arg2[%c0_1, %c0_2] : memref<4x128xf32, #tpu.memory_space<vmem>>, vector<4x128xf32>
    %2 = arith.addf %1, %0 : vector<4x128xf32>
    %c0_3 = arith.constant 0 : index
    %c0_4 = arith.constant 0 : index
    %3 = vector.load %arg5[%c0_3, %c0_4] : memref<128x128xf32, #tpu.memory_space<vmem>>, vector<128x128xf32>
    %cst = arith.constant dense<0.000000e+00> : vector<4x128xf32>
    %4 = tpu.matmul %2, %3, %cst {dimension_numbers = #tpu.dot_dimension_numbers<[1], [0], [0], [1], [0, 0, 1, 1], [], []>, precision = #tpu.contract_precision<fp32>} : vector<4x128xf32>, vector<128x128xf32>, vector<4x128xf32> -> vector<4x128xf32>
    %cst_5 = arith.constant 3.125000e-02 : f32
    %5 = vector.broadcast %cst_5 : f32 to vector<4x128xf32>
    %6 = arith.mulf %4, %5 : vector<4x128xf32>
    %7 = arith.subf %2, %6 : vector<4x128xf32>
    %8 = arith.mulf %7, %7 : vector<4x128xf32>
    %cst_6 = arith.constant dense<0.000000e+00> : vector<4x128xf32>
    %9 = tpu.matmul %8, %3, %cst_6 {dimension_numbers = #tpu.dot_dimension_numbers<[1], [0], [0], [1], [0, 0, 1, 1], [], []>, precision = #tpu.contract_precision<fp32>} : vector<4x128xf32>, vector<128x128xf32>, vector<4x128xf32> -> vector<4x128xf32>
    %cst_7 = arith.constant 3.125000e-02 : f32
    %10 = vector.broadcast %cst_7 : f32 to vector<4x128xf32>
    %11 = arith.mulf %9, %10 : vector<4x128xf32>
    %cst_8 = arith.constant 9.99999974E-6 : f32
    %12 = vector.broadcast %cst_8 : f32 to vector<4x128xf32>
    %13 = arith.addf %11, %12 : vector<4x128xf32>
    %14 = math.rsqrt %13 : vector<4x128xf32>
    %15 = arith.mulf %7, %14 : vector<4x128xf32>
    %c0_9 = arith.constant 0 : index
    %c0_10 = arith.constant 0 : index
    %16 = vector.load %arg3[%c0_9, %c0_10] : memref<1x128xf32, #tpu.memory_space<vmem>>, vector<1x128xf32>
    %17 = vector.broadcast %16 : vector<1x128xf32> to vector<4x128xf32>
    %18 = arith.mulf %15, %17 : vector<4x128xf32>
    %c0_11 = arith.constant 0 : index
    %c0_12 = arith.constant 0 : index
    %19 = vector.load %arg4[%c0_11, %c0_12] : memref<1x128xf32, #tpu.memory_space<vmem>>, vector<1x128xf32>
    %20 = vector.broadcast %19 : vector<1x128xf32> to vector<4x128xf32>
    %21 = arith.addf %18, %20 : vector<4x128xf32>
    %c0_13 = arith.constant 0 : index
    %c0_14 = arith.constant 0 : index
    %22 = vector.load %arg6[%c0_13, %c0_14] : memref<4x128xf32, #tpu.memory_space<vmem>>, vector<4x128xf32>
    tpu.vector_store %arg6[%c0_13, %c0_14], %21 {strides = array<i32>} : memref<4x128xf32, #tpu.memory_space<vmem>>, vector<4x128xf32>,
    return
  }
  func.func @transform_0(%arg0: i32) -> (i32, i32) {
    %c0_i32 = arith.constant 0 : i32
    %c0_i32_0 = arith.constant 0 : i32
    return %arg0, %c0_i32 : i32, i32
  }
  func.func @transform_1(%arg0: i32) -> (i32, i32) {
    %c0_i32 = arith.constant 0 : i32
    %c0_i32_0 = arith.constant 0 : i32
    return %arg0, %c0_i32 : i32, i32
  }
  func.func @transform_2(%arg0: i32) -> (i32, i32) {
    %c0_i32 = arith.constant 0 : i32
    %c0_i32_0 = arith.constant 0 : i32
    %c0_i32_1 = arith.constant 0 : i32
    return %c0_i32, %c0_i32_0 : i32, i32
  }
  func.func @transform_3(%arg0: i32) -> (i32, i32) {
    %c0_i32 = arith.constant 0 : i32
    %c0_i32_0 = arith.constant 0 : i32
    %c0_i32_1 = arith.constant 0 : i32
    return %c0_i32, %c0_i32_0 : i32, i32
  }
  func.func @transform_4(%arg0: i32) -> (i32, i32) {
    %c0_i32 = arith.constant 0 : i32
    %c0_i32_0 = arith.constant 0 : i32
    %c0_i32_1 = arith.constant 0 : i32
    return %c0_i32, %c0_i32_0 : i32, i32
  }
  func.func @transform_5(%arg0: i32) -> (i32, i32) {
    %c0_i32 = arith.constant 0 : i32
    %c0_i32_0 = arith.constant 0 : i32
    return %arg0, %c0_i32 : i32, i32
  }
}

</mosaic_0001>

<llo_original>
// kernel: tpu_custom_call.1
$region0: #{tpu_custom_call.1}
  #allocation0 [shape = 'u32[]', space=smem, size = 0x4, offset = 0x4, fixed_abs, tag = 'smem constant byte address 0x4 - core index']
  #allocation1 [shape = 'u32[144,128]{1,0:T(1,128)}', space=vmem, size = 0x12000, scoped, tag = 'internal scratch']
  %s0 = inlined_call_operand.hbm [shape: f32[4,128], index: 0, kind: input, shape index: {}]
  %s1 = inlined_call_operand.hbm [shape: f32[4,128], index: 1, kind: input, shape index: {}]
  %s2 = inlined_call_operand.vmem [shape: f32[1,128], index: 2, kind: input, shape index: {}]
  %s3 = inlined_call_operand.vmem [shape: f32[1,128], index: 3, kind: input, shape index: {}]
  %s4 = inlined_call_operand.hbm [shape: f32[128,128], index: 4, kind: input, shape index: {}]
  %s5 = inlined_call_operand.hbm [shape: f32[4,128], index: 5, kind: output, shape index: {}]
  %s6 = sld [smem:[#allocation0]]
  $region42: #{tpu_custom_call.1} parent=0
    _
  %s8 = ssub.s32 1, %s6
  %s9 = scalar_select 0, %s8, %s6
  $region1: #{tpu_custom_call.1} parent=0
    #allocation2 [shape = 'u8[2048]{0}', space=vmem, size = 0x800, scoped, tag = 'input window, operand 0, single buffered']
    #allocation3 [shape = 's32[1]{0}', space=sflag, size = 0x4, scoped, tag = 'scoped memory for tpu_custom_call.1']
    #allocation4 [shape = 's32[1]{0}', space=sflag, size = 0x4, scoped, tag = 'scoped memory for tpu_custom_call.1']
    #allocation5 [shape = 'u8[2048]{0}', space=vmem, size = 0x800, scoped, tag = 'input window, operand 1, single buffered']
    #allocation6 [shape = 's32[1]{0}', space=sflag, size = 0x4, scoped, tag = 'scoped memory for tpu_custom_call.1']
    #allocation7 [shape = 'u8[65536]{0}', space=vmem, size = 0x10000, scoped, tag = 'input window, operand 4, single buffered']
    #allocation8 [shape = 'u8[2048]{0}', space=vmem, size = 0x800, scoped, tag = 'output window, operand 0, single buffered']
    %10 = vsyncpa [#allocation3], 0
    %11 = vsyncpa [#allocation6], 0
    %12 = vsyncpa [#allocation4], 0
    // Predicated region
    $region2: #{tpu_custom_call.1} parent=1 // pred_check
      _
    $region3: #{tpu_custom_call.1} parent=1 // pred_check_branch
      %14 = sbr.rel (0) target = $region5
    $region4: #{tpu_custom_call.1} parent=1 // pred_region
      %s16 = ssub.s32 64, 64
      %17 = vsyncadd [#allocation3], %s16
      %s19 = sshll.u32 [#allocation2], 4
      %s20 = int_to_ptr.vmem [resolvable:$true] %s19
      %22 = dma.hbm_to_vmem [thread:$0]  %s0, 64, %s20, [#allocation3]
    $region5: #{tpu_custom_call.1} parent=1 // pred_fallthru
      _
    // Predicated region
    $region6: #{tpu_custom_call.1} parent=1 // pred_check
      _
    $region7: #{tpu_custom_call.1} parent=1 // pred_check_branch
      %24 = sbr.rel (0) target = $region9
    $region8: #{tpu_custom_call.1} parent=1 // pred_region
      %s26 = ssub.s32 64, 64
      %27 = vsyncadd [#allocation6], %s26
      %s29 = sshll.u32 [#allocation5], 4
      %s30 = int_to_ptr.vmem [resolvable:$true] %s29
      %32 = dma.hbm_to_vmem [thread:$0]  %s1, 64, %s30, [#allocation6]
    $region9: #{tpu_custom_call.1} parent=1 // pred_fallthru
      _
    // Predicated region
    $region10: #{tpu_custom_call.1} parent=1 // pred_check
      _
    $region11: #{tpu_custom_call.1} parent=1 // pred_check_branch
      %34 = sbr.rel (0) target = $region13
    $region12: #{tpu_custom_call.1} parent=1 // pred_region
      _
    $region13: #{tpu_custom_call.1} parent=1 // pred_fallthru
      _
    // Predicated region
    $region14: #{tpu_custom_call.1} parent=1 // pred_check
      _
    $region15: #{tpu_custom_call.1} parent=1 // pred_check_branch
      %36 = sbr.rel (0) target = $region17
    $region16: #{tpu_custom_call.1} parent=1 // pred_region
      _
    $region17: #{tpu_custom_call.1} parent=1 // pred_fallthru
      _
    // Predicated region
    $region18: #{tpu_custom_call.1} parent=1 // pred_check
      _
    $region19: #{tpu_custom_call.1} parent=1 // pred_check_branch
      %38 = sbr.rel (0) target = $region21
    $region20: #{tpu_custom_call.1} parent=1 // pred_region
      %s40 = ssub.s32 2048, 2048
      %41 = vsyncadd [#allocation6], %s40
      %s42 = sshll.u32 [#allocation7], 4
      %s43 = int_to_ptr.vmem [resolvable:$true] %s42
      %48 = dma.hbm_to_vmem [thread:$0]  %s4, 2048, %s43, [#allocation6], 128, 128, 8
    $region21: #{tpu_custom_call.1} parent=1 // pred_fallthru
      _
    // Predicated region
    $region22: #{tpu_custom_call.1} parent=1 // pred_check
      _
    $region23: #{tpu_custom_call.1} parent=1 // pred_check_branch
      %50 = sbr.rel (0) target = $region25
    $region24: #{tpu_custom_call.1} parent=1 // pred_region
      %51 = dma.done [#allocation3], 64
    $region25: #{tpu_custom_call.1} parent=1 // pred_fallthru
      _
    // Predicated region
    $region26: #{tpu_custom_call.1} parent=1 // pred_check
      _
    $region27: #{tpu_custom_call.1} parent=1 // pred_check_branch
      %53 = sbr.rel (0) target = $region29
    $region28: #{tpu_custom_call.1} parent=1 // pred_region
      %54 = dma.done [#allocation6], 64
    $region29: #{tpu_custom_call.1} parent=1 // pred_fallthru
      _
    // Predicated region
    $region30: #{tpu_custom_call.1} parent=1 // pred_check
      _
    $region31: #{tpu_custom_call.1} parent=1 // pred_check_branch
      %56 = sbr.rel (0) target = $region33
    $region32: #{tpu_custom_call.1} parent=1 // pred_region
      %57 = dma.done [#allocation6], 2048
    $region33: #{tpu_custom_call.1} parent=1 // pred_fallthru
      _
    %v58 = vld [vmem:[#allocation2] sm:$0xf]
    %v59 = vld [vmem:[#allocation5] sm:$0xf]
    %v60 = vadd.f32 %v59, %v58
    %v61 = vld [vmem:[#allocation7] sm:$0xff]
    %v62 = vld [vmem:[#allocation7 + $0x8] sm:$0xff]
    %v63 = vld [vmem:[#allocation7 + $0x10] sm:$0xff]
    %v64 = vld [vmem:[#allocation7 + $0x18] sm:$0xff]
    %v65 = vld [vmem:[#allocation7 + $0x20] sm:$0xff]
    %v66 = vld [vmem:[#allocation7 + $0x28] sm:$0xff]
    %v67 = vld [vmem:[#allocation7 + $0x30] sm:$0xff]
    %v68 = vld [vmem:[#allocation7 + $0x38] sm:$0xff]
    %v69 = vld [vmem:[#allocation7 + $0x40] sm:$0xff]
    %v70 = vld [vmem:[#allocation7 + $0x48] sm:$0xff]
    %v71 = vld [vmem:[#allocation7 + $0x50] sm:$0xff]
    %v72 = vld [vmem:[#allocation7 + $0x58] sm:$0xff]
    %v73 = vld [vmem:[#allocation7 + $0x60] sm:$0xff]
    %v74 = vld [vmem:[#allocation7 + $0x68] sm:$0xff]
    %v75 = vld [vmem:[#allocation7 + $0x70] sm:$0xff]
    %v76 = vld [vmem:[#allocation7 + $0x78] sm:$0xff]
    %77 = vmatprep.subr.mxu0 0.0
    %v78 = vand.u32 %v61, 4294901760
    %79 = vmatpush1.msra.mxu0 %v78
    %80 = vmatprep.subr.mxu0 0.0
    %v81 = vand.u32 %v62, 4294901760
    %82 = vmatpush1.msra.mxu0 %v81
    %83 = vmatprep.subr.mxu0 0.0
    %v84 = vand.u32 %v63, 4294901760
    %85 = vmatpush1.msra.mxu0 %v84
    %86 = vmatprep.subr.mxu0 0.0
    %v87 = vand.u32 %v64, 4294901760
    %88 = vmatpush1.msra.mxu0 %v87
    %89 = vmatprep.subr.mxu0 0.0
    %v90 = vand.u32 %v65, 4294901760
    %91 = vmatpush1.msra.mxu0 %v90
    %92 = vmatprep.subr.mxu0 0.0
    %v93 = vand.u32 %v66, 4294901760
    %94 = vmatpush1.msra.mxu0 %v93
    %95 = vmatprep.subr.mxu0 0.0
    %v96 = vand.u32 %v67, 4294901760
    %97 = vmatpush1.msra.mxu0 %v96
    %98 = vmatprep.subr.mxu0 0.0
    %v99 = vand.u32 %v68, 4294901760
    %100 = vmatpush1.msra.mxu0 %v99
    %101 = vmatprep.subr.mxu0 0.0
    %v102 = vand.u32 %v69, 4294901760
    %103 = vmatpush1.msra.mxu0 %v102
    %104 = vmatprep.subr.mxu0 0.0
    %v105 = vand.u32 %v70, 4294901760
    %106 = vmatpush1.msra.mxu0 %v105
    %107 = vmatprep.subr.mxu0 0.0
    %v108 = vand.u32 %v71, 4294901760
    %109 = vmatpush1.msra.mxu0 %v108
    %110 = vmatprep.subr.mxu0 0.0
    %v111 = vand.u32 %v72, 4294901760
    %112 = vmatpush1.msra.mxu0 %v111
    %113 = vmatprep.subr.mxu0 0.0
    %v114 = vand.u32 %v73, 4294901760
    %115 = vmatpush1.msra.mxu0 %v114
    %116 = vmatprep.subr.mxu0 0.0
    %v117 = vand.u32 %v74, 4294901760
    %118 = vmatpush1.msra.mxu0 %v117
    %119 = vmatprep.subr.mxu0 0.0
    %v120 = vand.u32 %v75, 4294901760
    %121 = vmatpush1.msra.mxu0 %v120
    %122 = vmatprep.subr.mxu0 0.0
    %v123 = vand.u32 %v76, 4294901760
    %124 = vmatpush1.msra.mxu0 %v123
    %125 = vmatprep.subr.mxu0 0.0
    %126 = vmatpush1.msra.mxu0 0.0
    %127 = vmatprep.subr.mxu0 0.0
    %128 = vmatpush1.msra.mxu0 0.0
    %129 = vmatprep.subr.mxu0 0.0
    %130 = vmatpush1.msra.mxu0 0.0
    %131 = vmatprep.subr.mxu0 0.0
    %132 = vmatpush1.msra.mxu0 0.0
    %133 = vmatprep.subr.mxu0 0.0
    %134 = vmatpush1.msra.mxu0 0.0
    %135 = vmatprep.subr.mxu0 0.0
    %136 = vmatpush1.msra.mxu0 0.0
    %137 = vmatprep.subr.mxu0 0.0
    %138 = vmatpush1.msra.mxu0 0.0
    %139 = vmatprep.subr.mxu0 0.0
    %140 = vmatpush1.msra.mxu0 0.0
    %141 = vmatprep.subr.mxu0 0.0
    %142 = vmatpush1.msra.mxu0 0.0
    %143 = vmatprep.subr.mxu0 0.0
    %144 = vmatpush1.msra.mxu0 0.0
    %145 = vmatprep.subr.mxu0 0.0
    %146 = vmatpush1.msra.mxu0 0.0
    %147 = vmatprep.subr.mxu0 0.0
    %148 = vmatpush1.msra.mxu0 0.0
    %149 = vmatprep.subr.mxu0 0.0
    %150 = vmatpush1.msra.mxu0 0.0
    %151 = vmatprep.subr.mxu0 0.0
    %152 = vmatpush1.msra.mxu0 0.0
    %153 = vmatprep.subr.mxu0 0.0
    %154 = vmatpush1.msra.mxu0 0.0
    %155 = vmatprep.subr.mxu0 0.0
    %156 = vmatpush1.msra.mxu0 0.0
    %157 = vmatprep.mubr.f32.mxu0 0.0
    %v158 = vand.u32 %v60, 4294901760
    %v159 = vsub.f32 %v60, %v158
    %v160 = vand.u32 %v159, 4294901760
    %v161 = vsub.f32 %v159, %v160
    %v162 = vand.u32 %v161, 4294901760
    %163 = vmatmul.mubr.f32.gmra.mrb[0].mxu0 %v162
    %v164 = vpop.f32.mrb[0].mxu0
    %v165 = vadd.f32 0.0, %v164
    %v166 = vpop.f32.mrb[0].mxu0
    %167 = vdwg.mxu0
    %168 = vmatprep.subr.mxu0 0.0
    %v169 = vand.u32 %v61, 4294901760
    %v170 = vsub.f32 %v61, %v169
    %v171 = vand.u32 %v170, 4294901760
    %v172 = vsub.f32 %v170, %v171
    %v173 = vand.u32 %v172, 4294901760
    %174 = vmatpush1.msra.mxu0 %v173
    %175 = vmatprep.subr.mxu0 0.0
    %v176 = vand.u32 %v62, 4294901760
    %v177 = vsub.f32 %v62, %v176
    %v178 = vand.u32 %v177, 4294901760
    %v179 = vsub.f32 %v177, %v178
    %v180 = vand.u32 %v179, 4294901760
    %181 = vmatpush1.msra.mxu0 %v180
    %182 = vmatprep.subr.mxu0 0.0
    %v183 = vand.u32 %v63, 4294901760
    %v184 = vsub.f32 %v63, %v183
    %v185 = vand.u32 %v184, 4294901760
    %v186 = vsub.f32 %v184, %v185
    %v187 = vand.u32 %v186, 4294901760
    %188 = vmatpush1.msra.mxu0 %v187
    %189 = vmatprep.subr.mxu0 0.0
    %v190 = vand.u32 %v64, 4294901760
    %v191 = vsub.f32 %v64, %v190
    %v192 = vand.u32 %v191, 4294901760
    %v193 = vsub.f32 %v191, %v192
    %v194 = vand.u32 %v193, 4294901760
    %195 = vmatpush1.msra.mxu0 %v194
    %196 = vmatprep.subr.mxu0 0.0
    %v197 = vand.u32 %v65, 4294901760
    %v198 = vsub.f32 %v65, %v197
    %v199 = vand.u32 %v198, 4294901760
    %v200 = vsub.f32 %v198, %v199
    %v201 = vand.u32 %v200, 4294901760
    %202 = vmatpush1.msra.mxu0 %v201
    %203 = vmatprep.subr.mxu0 0.0
    %v204 = vand.u32 %v66, 4294901760
    %v205 = vsub.f32 %v66, %v204
    %v206 = vand.u32 %v205, 4294901760
    %v207 = vsub.f32 %v205, %v206
    %v208 = vand.u32 %v207, 4294901760
    %209 = vmatpush1.msra.mxu0 %v208
    %210 = vmatprep.subr.mxu0 0.0
    %v211 = vand.u32 %v67, 4294901760
    %v212 = vsub.f32 %v67, %v211
    %v213 = vand.u32 %v212, 4294901760
    %v214 = vsub.f32 %v212, %v213
    %v215 = vand.u32 %v214, 4294901760
    %216 = vmatpush1.msra.mxu0 %v215
    %217 = vmatprep.subr.mxu0 0.0
    %v218 = vand.u32 %v68, 4294901760
    %v219 = vsub.f32 %v68, %v218
    %v220 = vand.u32 %v219, 4294901760
    %v221 = vsub.f32 %v219, %v220
    %v222 = vand.u32 %v221, 4294901760
    %223 = vmatpush1.msra.mxu0 %v222
    %224 = vmatprep.subr.mxu0 0.0
    %v225 = vand.u32 %v69, 4294901760
    %v226 = vsub.f32 %v69, %v225
    %v227 = vand.u32 %v226, 4294901760
    %v228 = vsub.f32 %v226, %v227
    %v229 = vand.u32 %v228, 4294901760
    %230 = vmatpush1.msra.mxu0 %v229
    %231 = vmatprep.subr.mxu0 0.0
    %v232 = vand.u32 %v70, 4294901760
    %v233 = vsub.f32 %v70, %v232
    %v234 = vand.u32 %v233, 4294901760
    %v235 = vsub.f32 %v233, %v234
    %v236 = vand.u32 %v235, 4294901760
    %237 = vmatpush1.msra.mxu0 %v236
    %238 = vmatprep.subr.mxu0 0.0
    %v239 = vand.u32 %v71, 4294901760
    %v240 = vsub.f32 %v71, %v239
    %v241 = vand.u32 %v240, 4294901760
    %v242 = vsub.f32 %v240, %v241
    %v243 = vand.u32 %v242, 4294901760
    %244 = vmatpush1.msra.mxu0 %v243
    %245 = vmatprep.subr.mxu0 0.0
    %v246 = vand.u32 %v72, 4294901760
    %v247 = vsub.f32 %v72, %v246
    %v248 = vand.u32 %v247, 4294901760
    %v249 = vsub.f32 %v247, %v248
    %v250 = vand.u32 %v249, 4294901760
    %251 = vmatpush1.msra.mxu0 %v250
    %252 = vmatprep.subr.mxu0 0.0
    %v253 = vand.u32 %v73, 4294901760
    %v254 = vsub.f32 %v73, %v253
    %v255 = vand.u32 %v254, 4294901760
    %v256 = vsub.f32 %v254, %v255
    %v257 = vand.u32 %v256, 4294901760
    %258 = vmatpush1.msra.mxu0 %v257
    %259 = vmatprep.subr.mxu0 0.0
    %v260 = vand.u32 %v74, 4294901760
    %v261 = vsub.f32 %v74, %v260
    %v262 = vand.u32 %v261, 4294901760
    %v263 = vsub.f32 %v261, %v262
    %v264 = vand.u32 %v263, 4294901760
    %265 = vmatpush1.msra.mxu0 %v264
    %266 = vmatprep.subr.mxu0 0.0
    %v267 = vand.u32 %v75, 4294901760
    %v268 = vsub.f32 %v75, %v267
    %v269 = vand.u32 %v268, 4294901760
    %v270 = vsub.f32 %v268, %v269
    %v271 = vand.u32 %v270, 4294901760
    %272 = vmatpush1.msra.mxu0 %v271
    %273 = vmatprep.subr.mxu0 0.0
    %v274 = vand.u32 %v76, 4294901760
    %v275 = vsub.f32 %v76, %v274
    %v276 = vand.u32 %v275, 4294901760
    %v277 = vsub.f32 %v275, %v276
    %v278 = vand.u32 %v277, 4294901760
    %279 = vmatpush1.msra.mxu0 %v278
    %280 = vmatprep.subr.mxu0 0.0
    %281 = vmatpush1.msra.mxu0 0.0
    %282 = vmatprep.subr.mxu0 0.0
    %283 = vmatpush1.msra.mxu0 0.0
    %284 = vmatprep.subr.mxu0 0.0
    %285 = vmatpush1.msra.mxu0 0.0
    %286 = vmatprep.subr.mxu0 0.0
    %287 = vmatpush1.msra.mxu0 0.0
    %288 = vmatprep.subr.mxu0 0.0
    %289 = vmatpush1.msra.mxu0 0.0
    %290 = vmatprep.subr.mxu0 0.0
    %291 = vmatpush1.msra.mxu0 0.0
    %292 = vmatprep.subr.mxu0 0.0
    %293 = vmatpush1.msra.mxu0 0.0
    %294 = vmatprep.subr.mxu0 0.0
    %295 = vmatpush1.msra.mxu0 0.0
    %296 = vmatprep.subr.mxu0 0.0
    %297 = vmatpush1.msra.mxu0 0.0
    %298 = vmatprep.subr.mxu0 0.0
    %299 = vmatpush1.msra.mxu0 0.0
    %300 = vmatprep.subr.mxu0 0.0
    %301 = vmatpush1.msra.mxu0 0.0
    %302 = vmatprep.subr.mxu0 0.0
    %303 = vmatpush1.msra.mxu0 0.0
    %304 = vmatprep.subr.mxu0 0.0
    %305 = vmatpush1.msra.mxu0 0.0
    %306 = vmatprep.subr.mxu0 0.0
    %307 = vmatpush1.msra.mxu0 0.0
    %308 = vmatprep.subr.mxu0 0.0
    %309 = vmatpush1.msra.mxu0 0.0
    %310 = vmatprep.subr.mxu0 0.0
    %311 = vmatpush1.msra.mxu0 0.0
    %312 = vmatprep.mubr.f32.mxu0 0.0
    %v313 = vand.u32 %v60, 4294901760
    %314 = vmatmul.mubr.f32.gmra.mrb[0].mxu0 %v313
    %v315 = vpop.f32.mrb[0].mxu0
    %v316 = vadd.f32 %v165, %v315
    %v317 = vpop.f32.mrb[0].mxu0
    %318 = vdwg.mxu0
    %319 = vmatprep.subr.mxu0 0.0
    %v320 = vand.u32 %v61, 4294901760
    %v321 = vsub.f32 %v61, %v320
    %322 = vmatpush1.msra.mxu0 %v321
    %323 = vmatprep.subr.mxu0 0.0
    %v324 = vand.u32 %v62, 4294901760
    %v325 = vsub.f32 %v62, %v324
    %326 = vmatpush1.msra.mxu0 %v325
    %327 = vmatprep.subr.mxu0 0.0
    %v328 = vand.u32 %v63, 4294901760
    %v329 = vsub.f32 %v63, %v328
    %330 = vmatpush1.msra.mxu0 %v329
    %331 = vmatprep.subr.mxu0 0.0
    %v332 = vand.u32 %v64, 4294901760
    %v333 = vsub.f32 %v64, %v332
    %334 = vmatpush1.msra.mxu0 %v333
    %335 = vmatprep.subr.mxu0 0.0
    %v336 = vand.u32 %v65, 4294901760
    %v337 = vsub.f32 %v65, %v336
    %338 = vmatpush1.msra.mxu0 %v337
    %339 = vmatprep.subr.mxu0 0.0
    %v340 = vand.u32 %v66, 4294901760
    %v341 = vsub.f32 %v66, %v340
    %342 = vmatpush1.msra.mxu0 %v341
    %343 = vmatprep.subr.mxu0 0.0
    %v344 = vand.u32 %v67, 4294901760
    %v345 = vsub.f32 %v67, %v344
    %346 = vmatpush1.msra.mxu0 %v345
    %347 = vmatprep.subr.mxu0 0.0
    %v348 = vand.u32 %v68, 4294901760
    %v349 = vsub.f32 %v68, %v348
    %350 = vmatpush1.msra.mxu0 %v349
    %351 = vmatprep.subr.mxu0 0.0
    %v352 = vand.u32 %v69, 4294901760
    %v353 = vsub.f32 %v69, %v352
    %354 = vmatpush1.msra.mxu0 %v353
    %355 = vmatprep.subr.mxu0 0.0
    %v356 = vand.u32 %v70, 4294901760
    %v357 = vsub.f32 %v70, %v356
    %358 = vmatpush1.msra.mxu0 %v357
    %359 = vmatprep.subr.mxu0 0.0
    %v360 = vand.u32 %v71, 4294901760
    %v361 = vsub.f32 %v71, %v360
    %362 = vmatpush1.msra.mxu0 %v361
    %363 = vmatprep.subr.mxu0 0.0
    %v364 = vand.u32 %v72, 4294901760
    %v365 = vsub.f32 %v72, %v364
    %366 = vmatpush1.msra.mxu0 %v365
    %367 = vmatprep.subr.mxu0 0.0
    %v368 = vand.u32 %v73, 4294901760
    %v369 = vsub.f32 %v73, %v368
    %370 = vmatpush1.msra.mxu0 %v369
    %371 = vmatprep.subr.mxu0 0.0
    %v372 = vand.u32 %v74, 4294901760
    %v373 = vsub.f32 %v74, %v372
    %374 = vmatpush1.msra.mxu0 %v373
    %375 = vmatprep.subr.mxu0 0.0
    %v376 = vand.u32 %v75, 4294901760
    %v377 = vsub.f32 %v75, %v376
    %378 = vmatpush1.msra.mxu0 %v377
    %379 = vmatprep.subr.mxu0 0.0
    %v380 = vand.u32 %v76, 4294901760
    %v381 = vsub.f32 %v76, %v380
    %382 = vmatpush1.msra.mxu0 %v381
    %383 = vmatprep.subr.mxu0 0.0
    %384 = vmatpush1.msra.mxu0 0.0
    %385 = vmatprep.subr.mxu0 0.0
    %386 = vmatpush1.msra.mxu0 0.0
    %387 = vmatprep.subr.mxu0 0.0
    %388 = vmatpush1.msra.mxu0 0.0
    %389 = vmatprep.subr.mxu0 0.0
    %390 = vmatpush1.msra.mxu0 0.0
    %391 = vmatprep.subr.mxu0 0.0
    %392 = vmatpush1.msra.mxu0 0.0
    %393 = vmatprep.subr.mxu0 0.0
    %394 = vmatpush1.msra.mxu0 0.0
    %395 = vmatprep.subr.mxu0 0.0
    %396 = vmatpush1.msra.mxu0 0.0
    %397 = vmatprep.subr.mxu0 0.0
    %398 = vmatpush1.msra.mxu0 0.0
    %399 = vmatprep.subr.mxu0 0.0
    %400 = vmatpush1.msra.mxu0 0.0
    %401 = vmatprep.subr.mxu0 0.0
    %402 = vmatpush1.msra.mxu0 0.0
    %403 = vmatprep.subr.mxu0 0.0
    %404 = vmatpush1.msra.mxu0 0.0
    %405 = vmatprep.subr.mxu0 0.0
    %406 = vmatpush1.msra.mxu0 0.0
    %407 = vmatprep.subr.mxu0 0.0
    %408 = vmatpush1.msra.mxu0 0.0
    %409 = vmatprep.subr.mxu0 0.0
    %410 = vmatpush1.msra.mxu0 0.0
    %411 = vmatprep.subr.mxu0 0.0
    %412 = vmatpush1.msra.mxu0 0.0
    %413 = vmatprep.subr.mxu0 0.0
    %414 = vmatpush1.msra.mxu0 0.0
    %415 = vmatprep.mubr.f32.mxu0 0.0
    %v416 = vand.u32 %v60, 4294901760
    %v417 = vsub.f32 %v60, %v416
    %418 = vmatmul.mubr.f32.gmra.mrb[0].mxu0 %v417
    %v419 = vpop.f32.mrb[0].mxu0
    %v420 = vadd.f32 %v316, %v419
    %v421 = vpop.f32.mrb[0].mxu0
    %422 = vdwg.mxu0
    %423 = vmatprep.subr.mxu0 0.0
    %v424 = vand.u32 %v61, 4294901760
    %425 = vmatpush1.msra.mxu0 %v424
    %426 = vmatprep.subr.mxu0 0.0
    %v427 = vand.u32 %v62, 4294901760
    %428 = vmatpush1.msra.mxu0 %v427
    %429 = vmatprep.subr.mxu0 0.0
    %v430 = vand.u32 %v63, 4294901760
    %431 = vmatpush1.msra.mxu0 %v430
    %432 = vmatprep.subr.mxu0 0.0
    %v433 = vand.u32 %v64, 4294901760
    %434 = vmatpush1.msra.mxu0 %v433
    %435 = vmatprep.subr.mxu0 0.0
    %v436 = vand.u32 %v65, 4294901760
    %437 = vmatpush1.msra.mxu0 %v436
    %438 = vmatprep.subr.mxu0 0.0
    %v439 = vand.u32 %v66, 4294901760
    %440 = vmatpush1.msra.mxu0 %v439
    %441 = vmatprep.subr.mxu0 0.0
    %v442 = vand.u32 %v67, 4294901760
    %443 = vmatpush1.msra.mxu0 %v442
    %444 = vmatprep.subr.mxu0 0.0
    %v445 = vand.u32 %v68, 4294901760
    %446 = vmatpush1.msra.mxu0 %v445
    %447 = vmatprep.subr.mxu0 0.0
    %v448 = vand.u32 %v69, 4294901760
    %449 = vmatpush1.msra.mxu0 %v448
    %450 = vmatprep.subr.mxu0 0.0
    %v451 = vand.u32 %v70, 4294901760
    %452 = vmatpush1.msra.mxu0 %v451
    %453 = vmatprep.subr.mxu0 0.0
    %v454 = vand.u32 %v71, 4294901760
    %455 = vmatpush1.msra.mxu0 %v454
    %456 = vmatprep.subr.mxu0 0.0
    %v457 = vand.u32 %v72, 4294901760
    %458 = vmatpush1.msra.mxu0 %v457
    %459 = vmatprep.subr.mxu0 0.0
    %v460 = vand.u32 %v73, 4294901760
    %461 = vmatpush1.msra.mxu0 %v460
    %462 = vmatprep.subr.mxu0 0.0
    %v463 = vand.u32 %v74, 4294901760
    %464 = vmatpush1.msra.mxu0 %v463
    %465 = vmatprep.subr.mxu0 0.0
    %v466 = vand.u32 %v75, 4294901760
    %467 = vmatpush1.msra.mxu0 %v466
    %468 = vmatprep.subr.mxu0 0.0
    %v469 = vand.u32 %v76, 4294901760
    %470 = vmatpush1.msra.mxu0 %v469
    %471 = vmatprep.subr.mxu0 0.0
    %472 = vmatpush1.msra.mxu0 0.0
    %473 = vmatprep.subr.mxu0 0.0
    %474 = vmatpush1.msra.mxu0 0.0
    %475 = vmatprep.subr.mxu0 0.0
    %476 = vmatpush1.msra.mxu0 0.0
    %477 = vmatprep.subr.mxu0 0.0
    %478 = vmatpush1.msra.mxu0 0.0
    %479 = vmatprep.subr.mxu0 0.0
    %480 = vmatpush1.msra.mxu0 0.0
    %481 = vmatprep.subr.mxu0 0.0
    %482 = vmatpush1.msra.mxu0 0.0
    %483 = vmatprep.subr.mxu0 0.0
    %484 = vmatpush1.msra.mxu0 0.0
    %485 = vmatprep.subr.mxu0 0.0
    %486 = vmatpush1.msra.mxu0 0.0
    %487 = vmatprep.subr.mxu0 0.0
    %488 = vmatpush1.msra.mxu0 0.0
    %489 = vmatprep.subr.mxu0 0.0
    %490 = vmatpush1.msra.mxu0 0.0
    %491 = vmatprep.subr.mxu0 0.0
    %492 = vmatpush1.msra.mxu0 0.0
    %493 = vmatprep.subr.mxu0 0.0
    %494 = vmatpush1.msra.mxu0 0.0
    %495 = vmatprep.subr.mxu0 0.0
    %496 = vmatpush1.msra.mxu0 0.0
    %497 = vmatprep.subr.mxu0 0.0
    %498 = vmatpush1.msra.mxu0 0.0
    %499 = vmatprep.subr.mxu0 0.0
    %500 = vmatpush1.msra.mxu0 0.0
    %501 = vmatprep.subr.mxu0 0.0
    %502 = vmatpush1.msra.mxu0 0.0
    %503 = vmatprep.mubr.f32.mxu0 0.0
    %v504 = vand.u32 %v60, 4294901760
    %v505 = vsub.f32 %v60, %v504
    %v506 = vand.u32 %v505, 4294901760
    %507 = vmatmul.mubr.f32.gmra.mrb[0].mxu0 %v506
    %v508 = vpop.f32.mrb[0].mxu0
    %v509 = vadd.f32 %v420, %v508
    %v510 = vpop.f32.mrb[0].mxu0
    %511 = vdwg.mxu0
    %512 = vmatprep.subr.mxu0 0.0
    %v513 = vand.u32 %v61, 4294901760
    %v514 = vsub.f32 %v61, %v513
    %v515 = vand.u32 %v514, 4294901760
    %516 = vmatpush1.msra.mxu0 %v515
    %517 = vmatprep.subr.mxu0 0.0
    %v518 = vand.u32 %v62, 4294901760
    %v519 = vsub.f32 %v62, %v518
    %v520 = vand.u32 %v519, 4294901760
    %521 = vmatpush1.msra.mxu0 %v520
    %522 = vmatprep.subr.mxu0 0.0
    %v523 = vand.u32 %v63, 4294901760
    %v524 = vsub.f32 %v63, %v523
    %v525 = vand.u32 %v524, 4294901760
    %526 = vmatpush1.msra.mxu0 %v525
    %527 = vmatprep.subr.mxu0 0.0
    %v528 = vand.u32 %v64, 4294901760
    %v529 = vsub.f32 %v64, %v528
    %v530 = vand.u32 %v529, 4294901760
    %531 = vmatpush1.msra.mxu0 %v530
    %532 = vmatprep.subr.mxu0 0.0
    %v533 = vand.u32 %v65, 4294901760
    %v534 = vsub.f32 %v65, %v533
    %v535 = vand.u32 %v534, 4294901760
    %536 = vmatpush1.msra.mxu0 %v535
    %537 = vmatprep.subr.mxu0 0.0
    %v538 = vand.u32 %v66, 4294901760
    %v539 = vsub.f32 %v66, %v538
    %v540 = vand.u32 %v539, 4294901760
    %541 = vmatpush1.msra.mxu0 %v540
    %542 = vmatprep.subr.mxu0 0.0
    %v543 = vand.u32 %v67, 4294901760
    %v544 = vsub.f32 %v67, %v543
    %v545 = vand.u32 %v544, 4294901760
    %546 = vmatpush1.msra.mxu0 %v545
    %547 = vmatprep.subr.mxu0 0.0
    %v548 = vand.u32 %v68, 4294901760
    %v549 = vsub.f32 %v68, %v548
    %v550 = vand.u32 %v549, 4294901760
    %551 = vmatpush1.msra.mxu0 %v550
    %552 = vmatprep.subr.mxu0 0.0
    %v553 = vand.u32 %v69, 4294901760
    %v554 = vsub.f32 %v69, %v553
    %v555 = vand.u32 %v554, 4294901760
    %556 = vmatpush1.msra.mxu0 %v555
    %557 = vmatprep.subr.mxu0 0.0
    %v558 = vand.u32 %v70, 4294901760
    %v559 = vsub.f32 %v70, %v558
    %v560 = vand.u32 %v559, 4294901760
    %561 = vmatpush1.msra.mxu0 %v560
    %562 = vmatprep.subr.mxu0 0.0
    %v563 = vand.u32 %v71, 4294901760
    %v564 = vsub.f32 %v71, %v563
    %v565 = vand.u32 %v564, 4294901760
    %566 = vmatpush1.msra.mxu0 %v565
    %567 = vmatprep.subr.mxu0 0.0
    %v568 = vand.u32 %v72, 4294901760
    %v569 = vsub.f32 %v72, %v568
    %v570 = vand.u32 %v569, 4294901760
    %571 = vmatpush1.msra.mxu0 %v570
    %572 = vmatprep.subr.mxu0 0.0
    %v573 = vand.u32 %v73, 4294901760
    %v574 = vsub.f32 %v73, %v573
    %v575 = vand.u32 %v574, 4294901760
    %576 = vmatpush1.msra.mxu0 %v575
    %577 = vmatprep.subr.mxu0 0.0
    %v578 = vand.u32 %v74, 4294901760
    %v579 = vsub.f32 %v74, %v578
    %v580 = vand.u32 %v579, 4294901760
    %581 = vmatpush1.msra.mxu0 %v580
    %582 = vmatprep.subr.mxu0 0.0
    %v583 = vand.u32 %v75, 4294901760
    %v584 = vsub.f32 %v75, %v583
    %v585 = vand.u32 %v584, 4294901760
    %586 = vmatpush1.msra.mxu0 %v585
    %587 = vmatprep.subr.mxu0 0.0
    %v588 = vand.u32 %v76, 4294901760
    %v589 = vsub.f32 %v76, %v588
    %v590 = vand.u32 %v589, 4294901760
    %591 = vmatpush1.msra.mxu0 %v590
    %592 = vmatprep.subr.mxu0 0.0
    %593 = vmatpush1.msra.mxu0 0.0
    %594 = vmatprep.subr.mxu0 0.0
    %595 = vmatpush1.msra.mxu0 0.0
    %596 = vmatprep.subr.mxu0 0.0
    %597 = vmatpush1.msra.mxu0 0.0
    %598 = vmatprep.subr.mxu0 0.0
    %599 = vmatpush1.msra.mxu0 0.0
    %600 = vmatprep.subr.mxu0 0.0
    %601 = vmatpush1.msra.mxu0 0.0
    %602 = vmatprep.subr.mxu0 0.0
    %603 = vmatpush1.msra.mxu0 0.0
    %604 = vmatprep.subr.mxu0 0.0
    %605 = vmatpush1.msra.mxu0 0.0
    %606 = vmatprep.subr.mxu0 0.0
    %607 = vmatpush1.msra.mxu0 0.0
    %608 = vmatprep.subr.mxu0 0.0
    %609 = vmatpush1.msra.mxu0 0.0
    %610 = vmatprep.subr.mxu0 0.0
    %611 = vmatpush1.msra.mxu0 0.0
    %612 = vmatprep.subr.mxu0 0.0
    %613 = vmatpush1.msra.mxu0 0.0
    %614 = vmatprep.subr.mxu0 0.0
    %615 = vmatpush1.msra.mxu0 0.0
    %616 = vmatprep.subr.mxu0 0.0
    %617 = vmatpush1.msra.mxu0 0.0
    %618 = vmatprep.subr.mxu0 0.0
    %619 = vmatpush1.msra.mxu0 0.0
    %620 = vmatprep.subr.mxu0 0.0
    %621 = vmatpush1.msra.mxu0 0.0
    %622 = vmatprep.subr.mxu0 0.0
    %623 = vmatpush1.msra.mxu0 0.0
    %624 = vmatprep.mubr.f32.mxu0 0.0
    %v625 = vand.u32 %v60, 4294901760
    %626 = vmatmul.mubr.f32.gmra.mrb[0].mxu0 %v625
    %v627 = vpop.f32.mrb[0].mxu0
    %v628 = vadd.f32 %v509, %v627
    %v629 = vpop.f32.mrb[0].mxu0
    %630 = vdwg.mxu0
    %631 = vmatprep.subr.mxu0 0.0
    %v632 = vand.u32 %v61, 4294901760
    %633 = vmatpush1.msra.mxu0 %v632
    %634 = vmatprep.subr.mxu0 0.0
    %v635 = vand.u32 %v62, 4294901760
    %636 = vmatpush1.msra.mxu0 %v635
    %637 = vmatprep.subr.mxu0 0.0
    %v638 = vand.u32 %v63, 4294901760
    %639 = vmatpush1.msra.mxu0 %v638
    %640 = vmatprep.subr.mxu0 0.0
    %v641 = vand.u32 %v64, 4294901760
    %642 = vmatpush1.msra.mxu0 %v641
    %643 = vmatprep.subr.mxu0 0.0
    %v644 = vand.u32 %v65, 4294901760
    %645 = vmatpush1.msra.mxu0 %v644
    %646 = vmatprep.subr.mxu0 0.0
    %v647 = vand.u32 %v66, 4294901760
    %648 = vmatpush1.msra.mxu0 %v647
    %649 = vmatprep.subr.mxu0 0.0
    %v650 = vand.u32 %v67, 4294901760
    %651 = vmatpush1.msra.mxu0 %v650
    %652 = vmatprep.subr.mxu0 0.0
    %v653 = vand.u32 %v68, 4294901760
    %654 = vmatpush1.msra.mxu0 %v653
    %655 = vmatprep.subr.mxu0 0.0
    %v656 = vand.u32 %v69, 4294901760
    %657 = vmatpush1.msra.mxu0 %v656
    %658 = vmatprep.subr.mxu0 0.0
    %v659 = vand.u32 %v70, 4294901760
    %660 = vmatpush1.msra.mxu0 %v659
    %661 = vmatprep.subr.mxu0 0.0
    %v662 = vand.u32 %v71, 4294901760
    %663 = vmatpush1.msra.mxu0 %v662
    %664 = vmatprep.subr.mxu0 0.0
    %v665 = vand.u32 %v72, 4294901760
    %666 = vmatpush1.msra.mxu0 %v665
    %667 = vmatprep.subr.mxu0 0.0
    %v668 = vand.u32 %v73, 4294901760
    %669 = vmatpush1.msra.mxu0 %v668
    %670 = vmatprep.subr.mxu0 0.0
    %v671 = vand.u32 %v74, 4294901760
    %672 = vmatpush1.msra.mxu0 %v671
    %673 = vmatprep.subr.mxu0 0.0
    %v674 = vand.u32 %v75, 4294901760
    %675 = vmatpush1.msra.mxu0 %v674
    %676 = vmatprep.subr.mxu0 0.0
    %v677 = vand.u32 %v76, 4294901760
    %678 = vmatpush1.msra.mxu0 %v677
    %679 = vmatprep.subr.mxu0 0.0
    %680 = vmatpush1.msra.mxu0 0.0
    %681 = vmatprep.subr.mxu0 0.0
    %682 = vmatpush1.msra.mxu0 0.0
    %683 = vmatprep.subr.mxu0 0.0
    %684 = vmatpush1.msra.mxu0 0.0
    %685 = vmatprep.subr.mxu0 0.0
    %686 = vmatpush1.msra.mxu0 0.0
    %687 = vmatprep.subr.mxu0 0.0
    %688 = vmatpush1.msra.mxu0 0.0
    %689 = vmatprep.subr.mxu0 0.0
    %690 = vmatpush1.msra.mxu0 0.0
    %691 = vmatprep.subr.mxu0 0.0
    %692 = vmatpush1.msra.mxu0 0.0
    %693 = vmatprep.subr.mxu0 0.0
    %694 = vmatpush1.msra.mxu0 0.0
    %695 = vmatprep.subr.mxu0 0.0
    %696 = vmatpush1.msra.mxu0 0.0
    %697 = vmatprep.subr.mxu0 0.0
    %698 = vmatpush1.msra.mxu0 0.0
    %699 = vmatprep.subr.mxu0 0.0
    %700 = vmatpush1.msra.mxu0 0.0
    %701 = vmatprep.subr.mxu0 0.0
    %702 = vmatpush1.msra.mxu0 0.0
    %703 = vmatprep.subr.mxu0 0.0
    %704 = vmatpush1.msra.mxu0 0.0
    %705 = vmatprep.subr.mxu0 0.0
    %706 = vmatpush1.msra.mxu0 0.0
    %707 = vmatprep.subr.mxu0 0.0
    %708 = vmatpush1.msra.mxu0 0.0
    %709 = vmatprep.subr.mxu0 0.0
    %710 = vmatpush1.msra.mxu0 0.0
    %711 = vmatprep.mubr.f32.mxu0 0.0
    %v712 = vand.u32 %v60, 4294901760
    %713 = vmatmul.mubr.f32.gmra.mrb[0].mxu0 %v712
    %v714 = vpop.f32.mrb[0].mxu0
    %v715 = vadd.f32 %v628, %v714
    %v716 = vpop.f32.mrb[0].mxu0
    %717 = vdwg.mxu0
    %v718 = vmul.f32 %v715, 0.03125
    %v719 = vsub.f32 %v60, %v718
    %v720 = vmul.f32 %v719, %v719
    %721 = vmatprep.subr.mxu0 0.0
    %v722 = vand.u32 %v61, 4294901760
    %723 = vmatpush1.msra.mxu0 %v722
    %724 = vmatprep.subr.mxu0 0.0
    %v725 = vand.u32 %v62, 4294901760
    %726 = vmatpush1.msra.mxu0 %v725
    %727 = vmatprep.subr.mxu0 0.0
    %v728 = vand.u32 %v63, 4294901760
    %729 = vmatpush1.msra.mxu0 %v728
    %730 = vmatprep.subr.mxu0 0.0
    %v731 = vand.u32 %v64, 4294901760
    %732 = vmatpush1.msra.mxu0 %v731
    %733 = vmatprep.subr.mxu0 0.0
    %v734 = vand.u32 %v65, 4294901760
    %735 = vmatpush1.msra.mxu0 %v734
    %736 = vmatprep.subr.mxu0 0.0
    %v737 = vand.u32 %v66, 4294901760
    %738 = vmatpush1.msra.mxu0 %v737
    %739 = vmatprep.subr.mxu0 0.0
    %v740 = vand.u32 %v67, 4294901760
    %741 = vmatpush1.msra.mxu0 %v740
    %742 = vmatprep.subr.mxu0 0.0
    %v743 = vand.u32 %v68, 4294901760
    %744 = vmatpush1.msra.mxu0 %v743
    %745 = vmatprep.subr.mxu0 0.0
    %v746 = vand.u32 %v69, 4294901760
    %747 = vmatpush1.msra.mxu0 %v746
    %748 = vmatprep.subr.mxu0 0.0
    %v749 = vand.u32 %v70, 4294901760
    %750 = vmatpush1.msra.mxu0 %v749
    %751 = vmatprep.subr.mxu0 0.0
    %v752 = vand.u32 %v71, 4294901760
    %753 = vmatpush1.msra.mxu0 %v752
    %754 = vmatprep.subr.mxu0 0.0
    %v755 = vand.u32 %v72, 4294901760
    %756 = vmatpush1.msra.mxu0 %v755
    %757 = vmatprep.subr.mxu0 0.0
    %v758 = vand.u32 %v73, 4294901760
    %759 = vmatpush1.msra.mxu0 %v758
    %760 = vmatprep.subr.mxu0 0.0
    %v761 = vand.u32 %v74, 4294901760
    %762 = vmatpush1.msra.mxu0 %v761
    %763 = vmatprep.subr.mxu0 0.0
    %v764 = vand.u32 %v75, 4294901760
    %765 = vmatpush1.msra.mxu0 %v764
    %766 = vmatprep.subr.mxu0 0.0
    %v767 = vand.u32 %v76, 4294901760
    %768 = vmatpush1.msra.mxu0 %v767
    %769 = vmatprep.subr.mxu0 0.0
    %770 = vmatpush1.msra.mxu0 0.0
    %771 = vmatprep.subr.mxu0 0.0
    %772 = vmatpush1.msra.mxu0 0.0
    %773 = vmatprep.subr.mxu0 0.0
    %774 = vmatpush1.msra.mxu0 0.0
    %775 = vmatprep.subr.mxu0 0.0
    %776 = vmatpush1.msra.mxu0 0.0
    %777 = vmatprep.subr.mxu0 0.0
    %778 = vmatpush1.msra.mxu0 0.0
    %779 = vmatprep.subr.mxu0 0.0
    %780 = vmatpush1.msra.mxu0 0.0
    %781 = vmatprep.subr.mxu0 0.0
    %782 = vmatpush1.msra.mxu0 0.0
    %783 = vmatprep.subr.mxu0 0.0
    %784 = vmatpush1.msra.mxu0 0.0
    %785 = vmatprep.subr.mxu0 0.0
    %786 = vmatpush1.msra.mxu0 0.0
    %787 = vmatprep.subr.mxu0 0.0
    %788 = vmatpush1.msra.mxu0 0.0
    %789 = vmatprep.subr.mxu0 0.0
    %790 = vmatpush1.msra.mxu0 0.0
    %791 = vmatprep.subr.mxu0 0.0
    %792 = vmatpush1.msra.mxu0 0.0
    %793 = vmatprep.subr.mxu0 0.0
    %794 = vmatpush1.msra.mxu0 0.0
    %795 = vmatprep.subr.mxu0 0.0
    %796 = vmatpush1.msra.mxu0 0.0
    %797 = vmatprep.subr.mxu0 0.0
    %798 = vmatpush1.msra.mxu0 0.0
    %799 = vmatprep.subr.mxu0 0.0
    %800 = vmatpush1.msra.mxu0 0.0
    %801 = vmatprep.mubr.f32.mxu0 0.0
    %v802 = vand.u32 %v720, 4294901760
    %v803 = vsub.f32 %v720, %v802
    %v804 = vand.u32 %v803, 4294901760
    %v805 = vsub.f32 %v803, %v804
    %v806 = vand.u32 %v805, 4294901760
    %807 = vmatmul.mubr.f32.gmra.mrb[0].mxu0 %v806
    %v808 = vpop.f32.mrb[0].mxu0
    %v809 = vadd.f32 0.0, %v808
    %v810 = vpop.f32.mrb[0].mxu0
    %811 = vdwg.mxu0
    %812 = vmatprep.subr.mxu0 0.0
    %v813 = vand.u32 %v61, 4294901760
    %v814 = vsub.f32 %v61, %v813
    %v815 = vand.u32 %v814, 4294901760
    %v816 = vsub.f32 %v814, %v815
    %v817 = vand.u32 %v816, 4294901760
    %818 = vmatpush1.msra.mxu0 %v817
    %819 = vmatprep.subr.mxu0 0.0
    %v820 = vand.u32 %v62, 4294901760
    %v821 = vsub.f32 %v62, %v820
    %v822 = vand.u32 %v821, 4294901760
    %v823 = vsub.f32 %v821, %v822
    %v824 = vand.u32 %v823, 4294901760
    %825 = vmatpush1.msra.mxu0 %v824
    %826 = vmatprep.subr.mxu0 0.0
    %v827 = vand.u32 %v63, 4294901760
    %v828 = vsub.f32 %v63, %v827
    %v829 = vand.u32 %v828, 4294901760
    %v830 = vsub.f32 %v828, %v829
    %v831 = vand.u32 %v830, 4294901760
    %832 = vmatpush1.msra.mxu0 %v831
    %833 = vmatprep.subr.mxu0 0.0
    %v834 = vand.u32 %v64, 4294901760
    %v835 = vsub.f32 %v64, %v834
    %v836 = vand.u32 %v835, 4294901760
    %v837 = vsub.f32 %v835, %v836
    %v838 = vand.u32 %v837, 4294901760
    %839 = vmatpush1.msra.mxu0 %v838
    %840 = vmatprep.subr.mxu0 0.0
    %v841 = vand.u32 %v65, 4294901760
    %v842 = vsub.f32 %v65, %v841
    %v843 = vand.u32 %v842, 4294901760
    %v844 = vsub.f32 %v842, %v843
    %v845 = vand.u32 %v844, 4294901760
    %846 = vmatpush1.msra.mxu0 %v845
    %847 = vmatprep.subr.mxu0 0.0
    %v848 = vand.u32 %v66, 4294901760
    %v849 = vsub.f32 %v66, %v848
    %v850 = vand.u32 %v849, 4294901760
    %v851 = vsub.f32 %v849, %v850
    %v852 = vand.u32 %v851, 4294901760
    %853 = vmatpush1.msra.mxu0 %v852
    %854 = vmatprep.subr.mxu0 0.0
    %v855 = vand.u32 %v67, 4294901760
    %v856 = vsub.f32 %v67, %v855
    %v857 = vand.u32 %v856, 4294901760
    %v858 = vsub.f32 %v856, %v857
    %v859 = vand.u32 %v858, 4294901760
    %860 = vmatpush1.msra.mxu0 %v859
    %861 = vmatprep.subr.mxu0 0.0
    %v862 = vand.u32 %v68, 4294901760
    %v863 = vsub.f32 %v68, %v862
    %v864 = vand.u32 %v863, 4294901760
    %v865 = vsub.f32 %v863, %v864
    %v866 = vand.u32 %v865, 4294901760
    %867 = vmatpush1.msra.mxu0 %v866
    %868 = vmatprep.subr.mxu0 0.0
    %v869 = vand.u32 %v69, 4294901760
    %v870 = vsub.f32 %v69, %v869
    %v871 = vand.u32 %v870, 4294901760
    %v872 = vsub.f32 %v870, %v871
    %v873 = vand.u32 %v872, 4294901760
    %874 = vmatpush1.msra.mxu0 %v873
    %875 = vmatprep.subr.mxu0 0.0
    %v876 = vand.u32 %v70, 4294901760
    %v877 = vsub.f32 %v70, %v876
    %v878 = vand.u32 %v877, 4294901760
    %v879 = vsub.f32 %v877, %v878
    %v880 = vand.u32 %v879, 4294901760
    %881 = vmatpush1.msra.mxu0 %v880
    %882 = vmatprep.subr.mxu0 0.0
    %v883 = vand.u32 %v71, 4294901760
    %v884 = vsub.f32 %v71, %v883
    %v885 = vand.u32 %v884, 4294901760
    %v886 = vsub.f32 %v884, %v885
    %v887 = vand.u32 %v886, 4294901760
    %888 = vmatpush1.msra.mxu0 %v887
    %889 = vmatprep.subr.mxu0 0.0
    %v890 = vand.u32 %v72, 4294901760
    %v891 = vsub.f32 %v72, %v890
    %v892 = vand.u32 %v891, 4294901760
    %v893 = vsub.f32 %v891, %v892
    %v894 = vand.u32 %v893, 4294901760
    %895 = vmatpush1.msra.mxu0 %v894
    %896 = vmatprep.subr.mxu0 0.0
    %v897 = vand.u32 %v73, 4294901760
    %v898 = vsub.f32 %v73, %v897
    %v899 = vand.u32 %v898, 4294901760
    %v900 = vsub.f32 %v898, %v899
    %v901 = vand.u32 %v900, 4294901760
    %902 = vmatpush1.msra.mxu0 %v901
    %903 = vmatprep.subr.mxu0 0.0
    %v904 = vand.u32 %v74, 4294901760
    %v905 = vsub.f32 %v74, %v904
    %v906 = vand.u32 %v905, 4294901760
    %v907 = vsub.f32 %v905, %v906
    %v908 = vand.u32 %v907, 4294901760
    %909 = vmatpush1.msra.mxu0 %v908
    %910 = vmatprep.subr.mxu0 0.0
    %v911 = vand.u32 %v75, 4294901760
    %v912 = vsub.f32 %v75, %v911
    %v913 = vand.u32 %v912, 4294901760
    %v914 = vsub.f32 %v912, %v913
    %v915 = vand.u32 %v914, 4294901760
    %916 = vmatpush1.msra.mxu0 %v915
    %917 = vmatprep.subr.mxu0 0.0
    %v918 = vand.u32 %v76, 4294901760
    %v919 = vsub.f32 %v76, %v918
    %v920 = vand.u32 %v919, 4294901760
    %v921 = vsub.f32 %v919, %v920
    %v922 = vand.u32 %v921, 4294901760
    %923 = vmatpush1.msra.mxu0 %v922
    %924 = vmatprep.subr.mxu0 0.0
    %925 = vmatpush1.msra.mxu0 0.0
    %926 = vmatprep.subr.mxu0 0.0
    %927 = vmatpush1.msra.mxu0 0.0
    %928 = vmatprep.subr.mxu0 0.0
    %929 = vmatpush1.msra.mxu0 0.0
    %930 = vmatprep.subr.mxu0 0.0
    %931 = vmatpush1.msra.mxu0 0.0
    %932 = vmatprep.subr.mxu0 0.0
    %933 = vmatpush1.msra.mxu0 0.0
    %934 = vmatprep.subr.mxu0 0.0
    %935 = vmatpush1.msra.mxu0 0.0
    %936 = vmatprep.subr.mxu0 0.0
    %937 = vmatpush1.msra.mxu0 0.0
    %938 = vmatprep.subr.mxu0 0.0
    %939 = vmatpush1.msra.mxu0 0.0
    %940 = vmatprep.subr.mxu0 0.0
    %941 = vmatpush1.msra.mxu0 0.0
    %942 = vmatprep.subr.mxu0 0.0
    %943 = vmatpush1.msra.mxu0 0.0
    %944 = vmatprep.subr.mxu0 0.0
    %945 = vmatpush1.msra.mxu0 0.0
    %946 = vmatprep.subr.mxu0 0.0
    %947 = vmatpush1.msra.mxu0 0.0
    %948 = vmatprep.subr.mxu0 0.0
    %949 = vmatpush1.msra.mxu0 0.0
    %950 = vmatprep.subr.mxu0 0.0
    %951 = vmatpush1.msra.mxu0 0.0
    %952 = vmatprep.subr.mxu0 0.0
    %953 = vmatpush1.msra.mxu0 0.0
    %954 = vmatprep.subr.mxu0 0.0
    %955 = vmatpush1.msra.mxu0 0.0
    %956 = vmatprep.mubr.f32.mxu0 0.0
    %v957 = vand.u32 %v720, 4294901760
    %958 = vmatmul.mubr.f32.gmra.mrb[0].mxu0 %v957
    %v959 = vpop.f32.mrb[0].mxu0
    %v960 = vadd.f32 %v809, %v959
    %v961 = vpop.f32.mrb[0].mxu0
    %962 = vdwg.mxu0
    %963 = vmatprep.subr.mxu0 0.0
    %v964 = vand.u32 %v61, 4294901760
    %v965 = vsub.f32 %v61, %v964
    %966 = vmatpush1.msra.mxu0 %v965
    %967 = vmatprep.subr.mxu0 0.0
    %v968 = vand.u32 %v62, 4294901760
    %v969 = vsub.f32 %v62, %v968
    %970 = vmatpush1.msra.mxu0 %v969
    %971 = vmatprep.subr.mxu0 0.0
    %v972 = vand.u32 %v63, 4294901760
    %v973 = vsub.f32 %v63, %v972
    %974 = vmatpush1.msra.mxu0 %v973
    %975 = vmatprep.subr.mxu0 0.0
    %v976 = vand.u32 %v64, 4294901760
    %v977 = vsub.f32 %v64, %v976
    %978 = vmatpush1.msra.mxu0 %v977
    %979 = vmatprep.subr.mxu0 0.0
    %v980 = vand.u32 %v65, 4294901760
    %v981 = vsub.f32 %v65, %v980
    %982 = vmatpush1.msra.mxu0 %v981
    %983 = vmatprep.subr.mxu0 0.0
    %v984 = vand.u32 %v66, 4294901760
    %v985 = vsub.f32 %v66, %v984
    %986 = vmatpush1.msra.mxu0 %v985
    %987 = vmatprep.subr.mxu0 0.0
    %v988 = vand.u32 %v67, 4294901760
    %v989 = vsub.f32 %v67, %v988
    %990 = vmatpush1.msra.mxu0 %v989
    %991 = vmatprep.subr.mxu0 0.0
    %v992 = vand.u32 %v68, 4294901760
    %v993 = vsub.f32 %v68, %v992
    %994 = vmatpush1.msra.mxu0 %v993
    %995 = vmatprep.subr.mxu0 0.0
    %v996 = vand.u32 %v69, 4294901760
    %v997 = vsub.f32 %v69, %v996
    %998 = vmatpush1.msra.mxu0 %v997
    %999 = vmatprep.subr.mxu0 0.0
    %v1000 = vand.u32 %v70, 4294901760
    %v1001 = vsub.f32 %v70, %v1000
    %1002 = vmatpush1.msra.mxu0 %v1001
    %1003 = vmatprep.subr.mxu0 0.0
    %v1004 = vand.u32 %v71, 4294901760
    %v1005 = vsub.f32 %v71, %v1004
    %1006 = vmatpush1.msra.mxu0 %v1005
    %1007 = vmatprep.subr.mxu0 0.0
    %v1008 = vand.u32 %v72, 4294901760
    %v1009 = vsub.f32 %v72, %v1008
    %1010 = vmatpush1.msra.mxu0 %v1009
    %1011 = vmatprep.subr.mxu0 0.0
    %v1012 = vand.u32 %v73, 4294901760
    %v1013 = vsub.f32 %v73, %v1012
    %1014 = vmatpush1.msra.mxu0 %v1013
    %1015 = vmatprep.subr.mxu0 0.0
    %v1016 = vand.u32 %v74, 4294901760
    %v1017 = vsub.f32 %v74, %v1016
    %1018 = vmatpush1.msra.mxu0 %v1017
    %1019 = vmatprep.subr.mxu0 0.0
    %v1020 = vand.u32 %v75, 4294901760
    %v1021 = vsub.f32 %v75, %v1020
    %1022 = vmatpush1.msra.mxu0 %v1021
    %1023 = vmatprep.subr.mxu0 0.0
    %v1024 = vand.u32 %v76, 4294901760
    %v1025 = vsub.f32 %v76, %v1024
    %1026 = vmatpush1.msra.mxu0 %v1025
    %1027 = vmatprep.subr.mxu0 0.0
    %1028 = vmatpush1.msra.mxu0 0.0
    %1029 = vmatprep.subr.mxu0 0.0
    %1030 = vmatpush1.msra.mxu0 0.0
    %1031 = vmatprep.subr.mxu0 0.0
    %1032 = vmatpush1.msra.mxu0 0.0
    %1033 = vmatprep.subr.mxu0 0.0
    %1034 = vmatpush1.msra.mxu0 0.0
    %1035 = vmatprep.subr.mxu0 0.0
    %1036 = vmatpush1.msra.mxu0 0.0
    %1037 = vmatprep.subr.mxu0 0.0
    %1038 = vmatpush1.msra.mxu0 0.0
    %1039 = vmatprep.subr.mxu0 0.0
    %1040 = vmatpush1.msra.mxu0 0.0
    %1041 = vmatprep.subr.mxu0 0.0
    %1042 = vmatpush1.msra.mxu0 0.0
    %1043 = vmatprep.subr.mxu0 0.0
    %1044 = vmatpush1.msra.mxu0 0.0
    %1045 = vmatprep.subr.mxu0 0.0
    %1046 = vmatpush1.msra.mxu0 0.0
    %1047 = vmatprep.subr.mxu0 0.0
    %1048 = vmatpush1.msra.mxu0 0.0
    %1049 = vmatprep.subr.mxu0 0.0
    %1050 = vmatpush1.msra.mxu0 0.0
    %1051 = vmatprep.subr.mxu0 0.0
    %1052 = vmatpush1.msra.mxu0 0.0
    %1053 = vmatprep.subr.mxu0 0.0
    %1054 = vmatpush1.msra.mxu0 0.0
    %1055 = vmatprep.subr.mxu0 0.0
    %1056 = vmatpush1.msra.mxu0 0.0
    %1057 = vmatprep.subr.mxu0 0.0
    %1058 = vmatpush1.msra.mxu0 0.0
    %1059 = vmatprep.mubr.f32.mxu0 0.0
    %v1060 = vand.u32 %v720, 4294901760
    %v1061 = vsub.f32 %v720, %v1060
    %1062 = vmatmul.mubr.f32.gmra.mrb[0].mxu0 %v1061
    %v1063 = vpop.f32.mrb[0].mxu0
    %v1064 = vadd.f32 %v960, %v1063
    %v1065 = vpop.f32.mrb[0].mxu0
    %1066 = vdwg.mxu0
    %1067 = vmatprep.subr.mxu0 0.0
    %v1068 = vand.u32 %v61, 4294901760
    %1069 = vmatpush1.msra.mxu0 %v1068
    %1070 = vmatprep.subr.mxu0 0.0
    %v1071 = vand.u32 %v62, 4294901760
    %1072 = vmatpush1.msra.mxu0 %v1071
    %1073 = vmatprep.subr.mxu0 0.0
    %v1074 = vand.u32 %v63, 4294901760
    %1075 = vmatpush1.msra.mxu0 %v1074
    %1076 = vmatprep.subr.mxu0 0.0
    %v1077 = vand.u32 %v64, 4294901760
    %1078 = vmatpush1.msra.mxu0 %v1077
    %1079 = vmatprep.subr.mxu0 0.0
    %v1080 = vand.u32 %v65, 4294901760
    %1081 = vmatpush1.msra.mxu0 %v1080
    %1082 = vmatprep.subr.mxu0 0.0
    %v1083 = vand.u32 %v66, 4294901760
    %1084 = vmatpush1.msra.mxu0 %v1083
    %1085 = vmatprep.subr.mxu0 0.0
    %v1086 = vand.u32 %v67, 4294901760
    %1087 = vmatpush1.msra.mxu0 %v1086
    %1088 = vmatprep.subr.mxu0 0.0
    %v1089 = vand.u32 %v68, 4294901760
    %1090 = vmatpush1.msra.mxu0 %v1089
    %1091 = vmatprep.subr.mxu0 0.0
    %v1092 = vand.u32 %v69, 4294901760
    %1093 = vmatpush1.msra.mxu0 %v1092
    %1094 = vmatprep.subr.mxu0 0.0
    %v1095 = vand.u32 %v70, 4294901760
    %1096 = vmatpush1.msra.mxu0 %v1095
    %1097 = vmatprep.subr.mxu0 0.0
    %v1098 = vand.u32 %v71, 4294901760
    %1099 = vmatpush1.msra.mxu0 %v1098
    %1100 = vmatprep.subr.mxu0 0.0
    %v1101 = vand.u32 %v72, 4294901760
    %1102 = vmatpush1.msra.mxu0 %v1101
    %1103 = vmatprep.subr.mxu0 0.0
    %v1104 = vand.u32 %v73, 4294901760
    %1105 = vmatpush1.msra.mxu0 %v1104
    %1106 = vmatprep.subr.mxu0 0.0
    %v1107 = vand.u32 %v74, 4294901760
    %1108 = vmatpush1.msra.mxu0 %v1107
    %1109 = vmatprep.subr.mxu0 0.0
    %v1110 = vand.u32 %v75, 4294901760
    %1111 = vmatpush1.msra.mxu0 %v1110
    %1112 = vmatprep.subr.mxu0 0.0
    %v1113 = vand.u32 %v76, 4294901760
    %1114 = vmatpush1.msra.mxu0 %v1113
    %1115 = vmatprep.subr.mxu0 0.0
    %1116 = vmatpush1.msra.mxu0 0.0
    %1117 = vmatprep.subr.mxu0 0.0
    %1118 = vmatpush1.msra.mxu0 0.0
    %1119 = vmatprep.subr.mxu0 0.0
    %1120 = vmatpush1.msra.mxu0 0.0
    %1121 = vmatprep.subr.mxu0 0.0
    %1122 = vmatpush1.msra.mxu0 0.0
    %1123 = vmatprep.subr.mxu0 0.0
    %1124 = vmatpush1.msra.mxu0 0.0
    %1125 = vmatprep.subr.mxu0 0.0
    %1126 = vmatpush1.msra.mxu0 0.0
    %1127 = vmatprep.subr.mxu0 0.0
    %1128 = vmatpush1.msra.mxu0 0.0
    %1129 = vmatprep.subr.mxu0 0.0
    %1130 = vmatpush1.msra.mxu0 0.0
    %1131 = vmatprep.subr.mxu0 0.0
    %1132 = vmatpush1.msra.mxu0 0.0
    %1133 = vmatprep.subr.mxu0 0.0
    %1134 = vmatpush1.msra.mxu0 0.0
    %1135 = vmatprep.subr.mxu0 0.0
    %1136 = vmatpush1.msra.mxu0 0.0
    %1137 = vmatprep.subr.mxu0 0.0
    %1138 = vmatpush1.msra.mxu0 0.0
    %1139 = vmatprep.subr.mxu0 0.0
    %1140 = vmatpush1.msra.mxu0 0.0
    %1141 = vmatprep.subr.mxu0 0.0
    %1142 = vmatpush1.msra.mxu0 0.0
    %1143 = vmatprep.subr.mxu0 0.0
    %1144 = vmatpush1.msra.mxu0 0.0
    %1145 = vmatprep.subr.mxu0 0.0
    %1146 = vmatpush1.msra.mxu0 0.0
    %1147 = vmatprep.mubr.f32.mxu0 0.0
    %v1148 = vand.u32 %v720, 4294901760
    %v1149 = vsub.f32 %v720, %v1148
    %v1150 = vand.u32 %v1149, 4294901760
    %1151 = vmatmul.mubr.f32.gmra.mrb[0].mxu0 %v1150
    %v1152 = vpop.f32.mrb[0].mxu0
    %v1153 = vadd.f32 %v1064, %v1152
    %v1154 = vpop.f32.mrb[0].mxu0
    %1155 = vdwg.mxu0
    %1156 = vmatprep.subr.mxu0 0.0
    %v1157 = vand.u32 %v61, 4294901760
    %v1158 = vsub.f32 %v61, %v1157
    %v1159 = vand.u32 %v1158, 4294901760
    %1160 = vmatpush1.msra.mxu0 %v1159
    %1161 = vmatprep.subr.mxu0 0.0
    %v1162 = vand.u32 %v62, 4294901760
    %v1163 = vsub.f32 %v62, %v1162
    %v1164 = vand.u32 %v1163, 4294901760
    %1165 = vmatpush1.msra.mxu0 %v1164
    %1166 = vmatprep.subr.mxu0 0.0
    %v1167 = vand.u32 %v63, 4294901760
    %v1168 = vsub.f32 %v63, %v1167
    %v1169 = vand.u32 %v1168, 4294901760
    %1170 = vmatpush1.msra.mxu0 %v1169
    %1171 = vmatprep.subr.mxu0 0.0
    %v1172 = vand.u32 %v64, 4294901760
    %v1173 = vsub.f32 %v64, %v1172
    %v1174 = vand.u32 %v1173, 4294901760
    %1175 = vmatpush1.msra.mxu0 %v1174
    %1176 = vmatprep.subr.mxu0 0.0
    %v1177 = vand.u32 %v65, 4294901760
    %v1178 = vsub.f32 %v65, %v1177
    %v1179 = vand.u32 %v1178, 4294901760
    %1180 = vmatpush1.msra.mxu0 %v1179
    %1181 = vmatprep.subr.mxu0 0.0
    %v1182 = vand.u32 %v66, 4294901760
    %v1183 = vsub.f32 %v66, %v1182
    %v1184 = vand.u32 %v1183, 4294901760
    %1185 = vmatpush1.msra.mxu0 %v1184
    %1186 = vmatprep.subr.mxu0 0.0
    %v1187 = vand.u32 %v67, 4294901760
    %v1188 = vsub.f32 %v67, %v1187
    %v1189 = vand.u32 %v1188, 4294901760
    %1190 = vmatpush1.msra.mxu0 %v1189
    %1191 = vmatprep.subr.mxu0 0.0
    %v1192 = vand.u32 %v68, 4294901760
    %v1193 = vsub.f32 %v68, %v1192
    %v1194 = vand.u32 %v1193, 4294901760
    %1195 = vmatpush1.msra.mxu0 %v1194
    %1196 = vmatprep.subr.mxu0 0.0
    %v1197 = vand.u32 %v69, 4294901760
    %v1198 = vsub.f32 %v69, %v1197
    %v1199 = vand.u32 %v1198, 4294901760
    %1200 = vmatpush1.msra.mxu0 %v1199
    %1201 = vmatprep.subr.mxu0 0.0
    %v1202 = vand.u32 %v70, 4294901760
    %v1203 = vsub.f32 %v70, %v1202
    %v1204 = vand.u32 %v1203, 4294901760
    %1205 = vmatpush1.msra.mxu0 %v1204
    %1206 = vmatprep.subr.mxu0 0.0
    %v1207 = vand.u32 %v71, 4294901760
    %v1208 = vsub.f32 %v71, %v1207
    %v1209 = vand.u32 %v1208, 4294901760
    %1210 = vmatpush1.msra.mxu0 %v1209
    %1211 = vmatprep.subr.mxu0 0.0
    %v1212 = vand.u32 %v72, 4294901760
    %v1213 = vsub.f32 %v72, %v1212
    %v1214 = vand.u32 %v1213, 4294901760
    %1215 = vmatpush1.msra.mxu0 %v1214
    %1216 = vmatprep.subr.mxu0 0.0
    %v1217 = vand.u32 %v73, 4294901760
    %v1218 = vsub.f32 %v73, %v1217
    %v1219 = vand.u32 %v1218, 4294901760
    %1220 = vmatpush1.msra.mxu0 %v1219
    %1221 = vmatprep.subr.mxu0 0.0
    %v1222 = vand.u32 %v74, 4294901760
    %v1223 = vsub.f32 %v74, %v1222
    %v1224 = vand.u32 %v1223, 4294901760
    %1225 = vmatpush1.msra.mxu0 %v1224
    %1226 = vmatprep.subr.mxu0 0.0
    %v1227 = vand.u32 %v75, 4294901760
    %v1228 = vsub.f32 %v75, %v1227
    %v1229 = vand.u32 %v1228, 4294901760
    %1230 = vmatpush1.msra.mxu0 %v1229
    %1231 = vmatprep.subr.mxu0 0.0
    %v1232 = vand.u32 %v76, 4294901760
    %v1233 = vsub.f32 %v76, %v1232
    %v1234 = vand.u32 %v1233, 4294901760
    %1235 = vmatpush1.msra.mxu0 %v1234
    %1236 = vmatprep.subr.mxu0 0.0
    %1237 = vmatpush1.msra.mxu0 0.0
    %1238 = vmatprep.subr.mxu0 0.0
    %1239 = vmatpush1.msra.mxu0 0.0
    %1240 = vmatprep.subr.mxu0 0.0
    %1241 = vmatpush1.msra.mxu0 0.0
    %1242 = vmatprep.subr.mxu0 0.0
    %1243 = vmatpush1.msra.mxu0 0.0
    %1244 = vmatprep.subr.mxu0 0.0
    %1245 = vmatpush1.msra.mxu0 0.0
    %1246 = vmatprep.subr.mxu0 0.0
    %1247 = vmatpush1.msra.mxu0 0.0
    %1248 = vmatprep.subr.mxu0 0.0
    %1249 = vmatpush1.msra.mxu0 0.0
    %1250 = vmatprep.subr.mxu0 0.0
    %1251 = vmatpush1.msra.mxu0 0.0
    %1252 = vmatprep.subr.mxu0 0.0
    %1253 = vmatpush1.msra.mxu0 0.0
    %1254 = vmatprep.subr.mxu0 0.0
    %1255 = vmatpush1.msra.mxu0 0.0
    %1256 = vmatprep.subr.mxu0 0.0
    %1257 = vmatpush1.msra.mxu0 0.0
    %1258 = vmatprep.subr.mxu0 0.0
    %1259 = vmatpush1.msra.mxu0 0.0
    %1260 = vmatprep.subr.mxu0 0.0
    %1261 = vmatpush1.msra.mxu0 0.0
    %1262 = vmatprep.subr.mxu0 0.0
    %1263 = vmatpush1.msra.mxu0 0.0
    %1264 = vmatprep.subr.mxu0 0.0
    %1265 = vmatpush1.msra.mxu0 0.0
    %1266 = vmatprep.subr.mxu0 0.0
    %1267 = vmatpush1.msra.mxu0 0.0
    %1268 = vmatprep.mubr.f32.mxu0 0.0
    %v1269 = vand.u32 %v720, 4294901760
    %1270 = vmatmul.mubr.f32.gmra.mrb[0].mxu0 %v1269
    %v1271 = vpop.f32.mrb[0].mxu0
    %v1272 = vadd.f32 %v1153, %v1271
    %v1273 = vpop.f32.mrb[0].mxu0
    %1274 = vdwg.mxu0
    %1275 = vmatprep.subr.mxu0 0.0
    %v1276 = vand.u32 %v61, 4294901760
    %1277 = vmatpush1.msra.mxu0 %v1276
    %1278 = vmatprep.subr.mxu0 0.0
    %v1279 = vand.u32 %v62, 4294901760
    %1280 = vmatpush1.msra.mxu0 %v1279
    %1281 = vmatprep.subr.mxu0 0.0
    %v1282 = vand.u32 %v63, 4294901760
    %1283 = vmatpush1.msra.mxu0 %v1282
    %1284 = vmatprep.subr.mxu0 0.0
    %v1285 = vand.u32 %v64, 4294901760
    %1286 = vmatpush1.msra.mxu0 %v1285
    %1287 = vmatprep.subr.mxu0 0.0
    %v1288 = vand.u32 %v65, 4294901760
    %1289 = vmatpush1.msra.mxu0 %v1288
    %1290 = vmatprep.subr.mxu0 0.0
    %v1291 = vand.u32 %v66, 4294901760
    %1292 = vmatpush1.msra.mxu0 %v1291
    %1293 = vmatprep.subr.mxu0 0.0
    %v1294 = vand.u32 %v67, 4294901760
    %1295 = vmatpush1.msra.mxu0 %v1294
    %1296 = vmatprep.subr.mxu0 0.0
    %v1297 = vand.u32 %v68, 4294901760
    %1298 = vmatpush1.msra.mxu0 %v1297
    %1299 = vmatprep.subr.mxu0 0.0
    %v1300 = vand.u32 %v69, 4294901760
    %1301 = vmatpush1.msra.mxu0 %v1300
    %1302 = vmatprep.subr.mxu0 0.0
    %v1303 = vand.u32 %v70, 4294901760
    %1304 = vmatpush1.msra.mxu0 %v1303
    %1305 = vmatprep.subr.mxu0 0.0
    %v1306 = vand.u32 %v71, 4294901760
    %1307 = vmatpush1.msra.mxu0 %v1306
    %1308 = vmatprep.subr.mxu0 0.0
    %v1309 = vand.u32 %v72, 4294901760
    %1310 = vmatpush1.msra.mxu0 %v1309
    %1311 = vmatprep.subr.mxu0 0.0
    %v1312 = vand.u32 %v73, 4294901760
    %1313 = vmatpush1.msra.mxu0 %v1312
    %1314 = vmatprep.subr.mxu0 0.0
    %v1315 = vand.u32 %v74, 4294901760
    %1316 = vmatpush1.msra.mxu0 %v1315
    %1317 = vmatprep.subr.mxu0 0.0
    %v1318 = vand.u32 %v75, 4294901760
    %1319 = vmatpush1.msra.mxu0 %v1318
    %1320 = vmatprep.subr.mxu0 0.0
    %v1321 = vand.u32 %v76, 4294901760
    %1322 = vmatpush1.msra.mxu0 %v1321
    %1323 = vmatprep.subr.mxu0 0.0
    %1324 = vmatpush1.msra.mxu0 0.0
    %1325 = vmatprep.subr.mxu0 0.0
    %1326 = vmatpush1.msra.mxu0 0.0
    %1327 = vmatprep.subr.mxu0 0.0
    %1328 = vmatpush1.msra.mxu0 0.0
    %1329 = vmatprep.subr.mxu0 0.0
    %1330 = vmatpush1.msra.mxu0 0.0
    %1331 = vmatprep.subr.mxu0 0.0
    %1332 = vmatpush1.msra.mxu0 0.0
    %1333 = vmatprep.subr.mxu0 0.0
    %1334 = vmatpush1.msra.mxu0 0.0
    %1335 = vmatprep.subr.mxu0 0.0
    %1336 = vmatpush1.msra.mxu0 0.0
    %1337 = vmatprep.subr.mxu0 0.0
    %1338 = vmatpush1.msra.mxu0 0.0
    %1339 = vmatprep.subr.mxu0 0.0
    %1340 = vmatpush1.msra.mxu0 0.0
    %1341 = vmatprep.subr.mxu0 0.0
    %1342 = vmatpush1.msra.mxu0 0.0
    %1343 = vmatprep.subr.mxu0 0.0
    %1344 = vmatpush1.msra.mxu0 0.0
    %1345 = vmatprep.subr.mxu0 0.0
    %1346 = vmatpush1.msra.mxu0 0.0
    %1347 = vmatprep.subr.mxu0 0.0
    %1348 = vmatpush1.msra.mxu0 0.0
    %1349 = vmatprep.subr.mxu0 0.0
    %1350 = vmatpush1.msra.mxu0 0.0
    %1351 = vmatprep.subr.mxu0 0.0
    %1352 = vmatpush1.msra.mxu0 0.0
    %1353 = vmatprep.subr.mxu0 0.0
    %1354 = vmatpush1.msra.mxu0 0.0
    %1355 = vmatprep.mubr.f32.mxu0 0.0
    %v1356 = vand.u32 %v720, 4294901760
    %1357 = vmatmul.mubr.f32.gmra.mrb[0].mxu0 %v1356
    %v1358 = vpop.f32.mrb[0].mxu0
    %v1359 = vadd.f32 %v1272, %v1358
    %v1360 = vpop.f32.mrb[0].mxu0
    %1361 = vdwg.mxu0
    %v1362 = vmul.f32 %v1359, 0.03125
    %v1363 = vadd.f32 %v1362, 1e-05
    %v1364 = vrsqrt.pop %v1363
    %v1365 = vmul.f32 %v719, %v1364
    %v1366 = vld [vmem:[%s2] sm:$0x1]
    %v1368 = vlaneseq
    %v1369 = vshrl.u32 %v1368, 7
    %v1370 = vsub.s32 0, %v1369
    %v1371 = vrot.slane %v1366, %v1370
    %v1373 = vmul.f32 %v1365, %v1371
    %v1374 = vld [vmem:[%s3] sm:$0x1]
    %v1376 = vlaneseq
    %v1377 = vshrl.u32 %v1376, 7
    %v1378 = vsub.s32 0, %v1377
    %v1379 = vrot.slane %v1374, %v1378
    %v1381 = vadd.f32 %v1373, %v1379
    %1382 = vst [vmem:[#allocation8] sm:$0xf] %v1381
    // Predicated region
    $region34: #{tpu_custom_call.1} parent=1 // pred_check
      _
    $region35: #{tpu_custom_call.1} parent=1 // pred_check_branch
      %1384 = sbr.rel (0) target = $region37
    $region36: #{tpu_custom_call.1} parent=1 // pred_region
      %s1386 = ssub.s32 64, 64
      %1387 = vsyncadd [#allocation4], %s1386
      %s1389 = sshll.u32 [#allocation8], 4
      %s1390 = int_to_ptr.vmem [resolvable:$true] %s1389
      %1392 = dma.vmem_to_hbm [thread:$0]  %s1390, 64, %s5, [#allocation4]
    $region37: #{tpu_custom_call.1} parent=1 // pred_fallthru
      _
    // Predicated region
    $region38: #{tpu_custom_call.1} parent=1 // pred_check
      _
    $region39: #{tpu_custom_call.1} parent=1 // pred_check_branch
      %1394 = sbr.rel (0) target = $region41
    $region40: #{tpu_custom_call.1} parent=1 // pred_region
      %1395 = dma.done [#allocation4], 64
    $region41: #{tpu_custom_call.1} parent=1 // pred_fallthru
      _
    %1396 = vsyncpa [#allocation3], 1
    %1397 = vsyncpa [#allocation6], 1
    %1398 = vsyncpa [#allocation4], 1

</llo_original>
